<compile_context>
chip_gen: v7x
topology: tpu7x:2x2x1
jax: 0.10.0
libtpu: 0.0.40
codegen_flags: <defaults>
</compile_context>

<pallas_src>
import functools

import jax
import jax.numpy as jnp
from jax.experimental import pallas as pl
from jax.experimental.pallas import tpu as pltpu


def _round_up(x, m):
    return ((x + m - 1) // m) * m


NUM_DISC = 2      # cls_disc = nn.Linear(H, 2)
NUM_SIM = 2       # lin1     = nn.Linear(H, 2)
HEAD_SLAB = 128   # lane-dense packed output slab for the two [B,·] heads
assert NUM_DISC + NUM_SIM <= HEAD_SLAB


# ----------------------------------------------------------------------------
# Fused [B,H]-path kernel (single pallas_call, two MXU passes):
#   pooled = tanh(cls @ Wp + bp)                      (f32 accumulate + tanh)
#   heads  = pooled @ [Wd | W1 | 0-pad] + [bd|b1|0]   (lane-dense 128-wide)
# cls arrives as f32 and is cast to bf16 in-kernel (VPU cast is free vs HBM).
# ----------------------------------------------------------------------------
def _fused_heads_kernel(cls_ref, pw_ref, pb_ref, hw_ref, hb_ref,
                        pooled_ref, heads_ref):
    cls_bf = cls_ref[...].astype(jnp.bfloat16)
    pooled = jnp.tanh(
        jnp.dot(cls_bf, pw_ref[...], preferred_element_type=jnp.float32)
        + pb_ref[...]
    )
    pooled_ref[...] = pooled.astype(pooled_ref.dtype)
    heads = jnp.dot(pooled.astype(jnp.bfloat16), hw_ref[...],
                    preferred_element_type=jnp.float32) + hb_ref[...]
    heads_ref[...] = heads.astype(heads_ref.dtype)


def fused_heads_pallas(cls, pooler_w_bf16, pooler_b, heads_w_bf16, heads_b):
    """cls: [B,H] f32. Returns (pooled [B,H] f32, logits_disc [B,2], logits_sim [B,2])."""
    B, H = cls.shape

    pooled, heads = pl.pallas_call(
        _fused_heads_kernel,
        out_shape=(
            jax.ShapeDtypeStruct((B, H), jnp.float32),
            jax.ShapeDtypeStruct((B, HEAD_SLAB), jnp.float32),
        ),
        grid=(1,),
        in_specs=[
            pl.BlockSpec((B, H), lambda i: (0, 0)),
            pl.BlockSpec((H, H), lambda i: (0, 0)),
            pl.BlockSpec((1, H), lambda i: (0, 0)),
            pl.BlockSpec((H, HEAD_SLAB), lambda i: (0, 0)),
            pl.BlockSpec((1, HEAD_SLAB), lambda i: (0, 0)),
        ],
        out_specs=(
            pl.BlockSpec((B, H), lambda i: (0, 0)),
            pl.BlockSpec((B, HEAD_SLAB), lambda i: (0, 0)),
        ),
        compiler_params=pltpu.CompilerParams(
            dimension_semantics=("arbitrary",)
        ),
    )(cls, pooler_w_bf16, pooler_b, heads_w_bf16, heads_b)

    logits_disc = heads[:, :NUM_DISC]
    logits_similarity = heads[:, NUM_DISC:NUM_DISC + NUM_SIM]
    return pooled, logits_disc, logits_similarity


# ----------------------------------------------------------------------------
# Token-level head (lin2): y = x @ w + b, tiled over M (rows), lane-dense N.
#   x: [M,K] f32 (cast to bf16 in-kernel), w: [K,Npad] bf16, b: [1,Npad] f32
# ----------------------------------------------------------------------------
def _token_head_kernel(x_ref, w_ref, b_ref, o_ref):
    x_bf = x_ref[...].astype(jnp.bfloat16)   # in-kernel cast: x read once as f32
    acc = jnp.dot(x_bf, w_ref[...], preferred_element_type=jnp.float32)
    o_ref[...] = (acc + b_ref[...]).astype(o_ref.dtype)


def token_head_pallas(x, w_packed_bf16, b_packed, n_out, *, tm_max=1024):
    """x: [M,K] f32, w_packed: [K,Npad] bf16, b_packed: [1,Npad] f32 -> [M,n_out] f32."""
    M, K = x.shape
    n_pad = w_packed_bf16.shape[1]

    # Row tile: multiple of 8, capped at tm_max (f32 x tile <= 4 MiB at K=1024,
    # double-buffered -> inside v7x's 32 MiB default scoped VMEM), and chosen so
    # the "parallel" M axis has >=2 steps to feed both v7x TensorCores.
    tm = min(tm_max, _round_up(max(pl.cdiv(M, 2), 1), 8))
    grid_m = pl.cdiv(M, tm)   # last block masked by Pallas (no pad copy of x)

    cost = pl.CostEstimate(
        flops=2 * M * K * n_pad,
        transcendentals=0,
        bytes_accessed=M * K * 4 + K * n_pad * 2 + n_pad * 4 + M * n_pad * 4,
    )

    out = pl.pallas_call(
        _token_head_kernel,
        out_shape=jax.ShapeDtypeStruct((M, n_pad), jnp.float32),
        grid=(grid_m,),
        in_specs=[
            pl.BlockSpec((tm, K), lambda i: (i, 0)),       # streamed over rows
            pl.BlockSpec((K, n_pad), lambda i: (0, 0)),    # weight stays resident
            pl.BlockSpec((1, n_pad), lambda i: (0, 0)),    # bias stays resident
        ],
        out_specs=pl.BlockSpec((tm, n_pad), lambda i: (i, 0)),
        compiler_params=pltpu.CompilerParams(
            dimension_semantics=("parallel",)              # v7x: shard M over 2 TCs
        ),
        cost_estimate=cost,
    )(x, w_packed_bf16, b_packed)

    # Lane slice of the 128-wide slab; under jit this fuses into the consumer.
    return out[:, :n_out]


# ----------------------------------------------------------------------------
# Minimal deterministic stand-in for `input_encoder_model`
# (BERT-style embeddings; the tanh pooler is fused into the heads kernel).
# Embedding gathers are glue (plain JAX).
# ----------------------------------------------------------------------------
def make_encoder_params(key, vocab_size, max_seq, hidden):
    k = jax.random.split(key, 5)
    scale = 0.02
    return {
        "word_emb": scale * jax.random.normal(k[0], (vocab_size, hidden), jnp.float32),
        "pos_emb": scale * jax.random.normal(k[1], (max_seq, hidden), jnp.float32),
        "type_emb": scale * jax.random.normal(k[2], (2, hidden), jnp.float32),
        "pooler_w": scale * jax.random.normal(k[3], (hidden, hidden), jnp.float32),
        "pooler_b": jnp.zeros((hidden,), jnp.float32),
    }


def make_main_params(key, hidden, n_tags):
    k = jax.random.split(key, 3)
    scale = 0.02
    return {
        "lin1_w": scale * jax.random.normal(k[0], (hidden, 2), jnp.float32),
        "lin1_b": jnp.zeros((2,), jnp.float32),
        "lin2_w": scale * jax.random.normal(k[1], (hidden, n_tags), jnp.float32),
        "lin2_b": jnp.zeros((n_tags,), jnp.float32),
        "disc_w": scale * jax.random.normal(k[2], (hidden, 2), jnp.float32),
        "disc_b": jnp.zeros((2,), jnp.float32),
    }


def prepare_params(enc_params, main_params):
    """One-time weight packing / casting (hoisted out of the per-call wrappers)."""
    H = enc_params["pooler_w"].shape[0]
    nd, ns = NUM_DISC, NUM_SIM

    # Pack cls_disc + lin1 weights into one [H, 128] bf16 lane-dense slab.
    heads_w = (jnp.zeros((H, HEAD_SLAB), jnp.float32)
               .at[:, :nd].set(main_params["disc_w"])
               .at[:, nd:nd + ns].set(main_params["lin1_w"])
               .astype(jnp.bfloat16))
    heads_b = (jnp.zeros((1, HEAD_SLAB), jnp.float32)
               .at[0, :nd].set(main_params["disc_b"])
               .at[0, nd:nd + ns].set(main_params["lin1_b"]))

    # lin2: pad N up to a 128-lane-dense slab, weights bf16, bias f32.
    K, N = main_params["lin2_w"].shape
    n_pad = _round_up(max(N, 128), 128)
    lin2_w = (jnp.zeros((K, n_pad), jnp.float32)
              .at[:, :N].set(main_params["lin2_w"])
              .astype(jnp.bfloat16))
    lin2_b = jnp.zeros((1, n_pad), jnp.float32).at[0, :N].set(main_params["lin2_b"])

    return {
        "word_emb": enc_params["word_emb"],
        "pos_emb": enc_params["pos_emb"],
        "type_emb": enc_params["type_emb"],
        "pooler_w": enc_params["pooler_w"].astype(jnp.bfloat16),
        "pooler_b": enc_params["pooler_b"].reshape(1, H).astype(jnp.float32),
        "heads_w": heads_w,
        "heads_b": heads_b,
        "lin2_w": lin2_w,
        "lin2_b": lin2_b,
    }


def encoder_embed(params, input_ids, attention_mask, token_type_ids):
    B, S = input_ids.shape
    tokens = (
        params["word_emb"][input_ids]
        + params["pos_emb"][:S][None, :, :]
        + params["type_emb"][token_type_ids]
    )
    tokens = tokens * attention_mask[..., None].astype(tokens.dtype)
    return tokens                                                   # [B, S, H]


# ----------------------------------------------------------------------------
# MainModule forward
# ----------------------------------------------------------------------------
def main_module_forward(params, input_ids, attention_mask, token_type_ids, *, n_tags):
    tokens_embedding = encoder_embed(params, input_ids, attention_mask, token_type_ids)
    B, S, H = tokens_embedding.shape
    cls = tokens_embedding[:, 0, :]                                 # [B, H] f32

    # Fused: pooler dense + tanh + cls_disc + lin1 in one Pallas kernel.
    # ReverseLayerF (GRL) is identity in the forward pass (only flips grads).
    # nn.Dropout(0.25) is identity at inference time.
    # TODO(synk): training-mode dropout (stochastic masking) not implemented.
    input_embedding, logits_disc, logits_similarity = fused_heads_pallas(
        cls, params["pooler_w"], params["pooler_b"],
        params["heads_w"], params["heads_b"],
    )                                                               # [B,H],[B,2],[B,2]

    tokens_flat = tokens_embedding.reshape(B * S, H)                # free view
    logits_pos = token_head_pallas(
        tokens_flat, params["lin2_w"], params["lin2_b"], n_tags
    ).reshape(B, S, n_tags)                                         # [B, S, n_tags]

    return {
        "logits_similarity": logits_similarity,
        "logits_disc": logits_disc,
        "logits_pos": logits_pos,
        "input_encoded": (tokens_embedding, input_embedding),
    }


if __name__ == "__main__":
    B, S, H = 2, 8, 32
    n_tags = 4
    vocab = 100

    root = jax.random.PRNGKey(0)
    k_enc, k_main, k_ids, k_types = jax.random.split(root, 4)

    enc_params = make_encoder_params(k_enc, vocab, S, H)
    main_params = make_main_params(k_main, H, n_tags)
    params = prepare_params(enc_params, main_params)   # one-time pack/cast

    input_ids = jax.random.randint(k_ids, (B, S), 0, vocab, dtype=jnp.int32)
    attention_mask = jnp.ones((B, S), jnp.int32)
    token_type_ids = jax.random.randint(k_types, (B, S), 0, 2, dtype=jnp.int32)

    fwd = jax.jit(functools.partial(main_module_forward, n_tags=n_tags))
    out = fwd(params, input_ids, attention_mask, token_type_ids)
    jax.block_until_ready(out)

    assert out["logits_similarity"].shape == (B, 2)
    assert out["logits_disc"].shape == (B, 2)
    assert out["logits_pos"].shape == (B, S, n_tags)
    assert out["input_encoded"][0].shape == (B, S, H)
    assert out["input_encoded"][1].shape == (B, H)
    print("KERNEL_OK")
</pallas_src>

<mosaic_0001>
module attributes {stable_mosaic.version = 11 : i64} {
  func.func @_fused_heads_kernel(%arg0: i32, %arg1: memref<2x32xf32, #tpu.memory_space<vmem>>, %arg2: memref<32x32xbf16, #tpu.memory_space<vmem>>, %arg3: memref<1x32xf32, #tpu.memory_space<vmem>>, %arg4: memref<32x128xbf16, #tpu.memory_space<vmem>>, %arg5: memref<1x128xf32, #tpu.memory_space<vmem>>, %arg6: memref<2x32xf32, #tpu.memory_space<vmem>>, %arg7: memref<2x128xf32, #tpu.memory_space<vmem>>) attributes {dimension_semantics = [#tpu.dimension_semantics<arbitrary>], iteration_bounds = array<i64: 1>, scalar_prefetch = 0 : i64, scratch_operands = 0 : i64, tpu.core_type = #tpu.core_type<tc>, window_params = [{pipeline_mode = #tpu.pipeline_mode<synchronous>, transform_indices = @transform_0, window_bounds = array<i64: 2, 32>}, {pipeline_mode = #tpu.pipeline_mode<synchronous>, transform_indices = @transform_1, window_bounds = array<i64: 32, 32>}, {pipeline_mode = #tpu.pipeline_mode<synchronous>, transform_indices = @transform_2, window_bounds = array<i64: 1, 32>}, {pipeline_mode = #tpu.pipeline_mode<synchronous>, transform_indices = @transform_3, window_bounds = array<i64: 32, 128>}, {pipeline_mode = #tpu.pipeline_mode<synchronous>, transform_indices = @transform_4, window_bounds = array<i64: 1, 128>}, {pipeline_mode = #tpu.pipeline_mode<synchronous>, transform_indices = @transform_5, window_bounds = array<i64: 2, 32>}, {pipeline_mode = #tpu.pipeline_mode<synchronous>, transform_indices = @transform_6, window_bounds = array<i64: 2, 128>}]} {
    %c0 = arith.constant 0 : index
    %c0_0 = arith.constant 0 : index
    %0 = vector.load %arg1[%c0, %c0_0] : memref<2x32xf32, #tpu.memory_space<vmem>>, vector<2x32xf32>
    %1 = arith.truncf %0 : vector<2x32xf32> to vector<2x32xbf16>
    %c0_1 = arith.constant 0 : index
    %c0_2 = arith.constant 0 : index
    %2 = vector.load %arg2[%c0_1, %c0_2] : memref<32x32xbf16, #tpu.memory_space<vmem>>, vector<32x32xbf16>
    %cst = arith.constant dense<0.000000e+00> : vector<2x32xf32>
    %3 = tpu.matmul %1, %2, %cst {dimension_numbers = #tpu.dot_dimension_numbers<[1], [0], [0], [1], [0, 0, 1, 1], [], []>} : vector<2x32xbf16>, vector<32x32xbf16>, vector<2x32xf32> -> vector<2x32xf32>
    %c0_3 = arith.constant 0 : index
    %c0_4 = arith.constant 0 : index
    %4 = vector.load %arg3[%c0_3, %c0_4] : memref<1x32xf32, #tpu.memory_space<vmem>>, vector<1x32xf32>
    %5 = vector.broadcast %4 : vector<1x32xf32> to vector<2x32xf32>
    %6 = arith.addf %3, %5 : vector<2x32xf32>
    %7 = math.tanh %6 : vector<2x32xf32>
    %c0_5 = arith.constant 0 : index
    %c0_6 = arith.constant 0 : index
    %8 = vector.load %arg6[%c0_5, %c0_6] : memref<2x32xf32, #tpu.memory_space<vmem>>, vector<2x32xf32>
    tpu.vector_store %arg6[%c0_5, %c0_6], %7 {strides = array<i32>} : memref<2x32xf32, #tpu.memory_space<vmem>>, vector<2x32xf32>,
    %9 = arith.truncf %7 : vector<2x32xf32> to vector<2x32xbf16>
    %c0_7 = arith.constant 0 : index
    %c0_8 = arith.constant 0 : index
    %10 = vector.load %arg4[%c0_7, %c0_8] : memref<32x128xbf16, #tpu.memory_space<vmem>>, vector<32x128xbf16>
    %cst_9 = arith.constant dense<0.000000e+00> : vector<2x128xf32>
    %11 = tpu.matmul %9, %10, %cst_9 {dimension_numbers = #tpu.dot_dimension_numbers<[1], [0], [0], [1], [0, 0, 1, 1], [], []>} : vector<2x32xbf16>, vector<32x128xbf16>, vector<2x128xf32> -> vector<2x128xf32>
    %c0_10 = arith.constant 0 : index
    %c0_11 = arith.constant 0 : index
    %12 = vector.load %arg5[%c0_10, %c0_11] : memref<1x128xf32, #tpu.memory_space<vmem>>, vector<1x128xf32>
    %13 = vector.broadcast %12 : vector<1x128xf32> to vector<2x128xf32>
    %14 = arith.addf %11, %13 : vector<2x128xf32>
    %c0_12 = arith.constant 0 : index
    %c0_13 = arith.constant 0 : index
    %15 = vector.load %arg7[%c0_12, %c0_13] : memref<2x128xf32, #tpu.memory_space<vmem>>, vector<2x128xf32>
    tpu.vector_store %arg7[%c0_12, %c0_13], %14 {strides = array<i32>} : memref<2x128xf32, #tpu.memory_space<vmem>>, vector<2x128xf32>,
    return
  }
  func.func @transform_0(%arg0: i32) -> (i32, i32) {
    %c0_i32 = arith.constant 0 : i32
    %c0_i32_0 = arith.constant 0 : i32
    %c0_i32_1 = arith.constant 0 : i32
    return %c0_i32, %c0_i32_0 : i32, i32
  }
  func.func @transform_1(%arg0: i32) -> (i32, i32) {
    %c0_i32 = arith.constant 0 : i32
    %c0_i32_0 = arith.constant 0 : i32
    %c0_i32_1 = arith.constant 0 : i32
    return %c0_i32, %c0_i32_0 : i32, i32
  }
  func.func @transform_2(%arg0: i32) -> (i32, i32) {
    %c0_i32 = arith.constant 0 : i32
    %c0_i32_0 = arith.constant 0 : i32
    %c0_i32_1 = arith.constant 0 : i32
    return %c0_i32, %c0_i32_0 : i32, i32
  }
  func.func @transform_3(%arg0: i32) -> (i32, i32) {
    %c0_i32 = arith.constant 0 : i32
    %c0_i32_0 = arith.constant 0 : i32
    %c0_i32_1 = arith.constant 0 : i32
    return %c0_i32, %c0_i32_0 : i32, i32
  }
  func.func @transform_4(%arg0: i32) -> (i32, i32) {
    %c0_i32 = arith.constant 0 : i32
    %c0_i32_0 = arith.constant 0 : i32
    %c0_i32_1 = arith.constant 0 : i32
    return %c0_i32, %c0_i32_0 : i32, i32
  }
  func.func @transform_5(%arg0: i32) -> (i32, i32) {
    %c0_i32 = arith.constant 0 : i32
    %c0_i32_0 = arith.constant 0 : i32
    %c0_i32_1 = arith.constant 0 : i32
    return %c0_i32, %c0_i32_0 : i32, i32
  }
  func.func @transform_6(%arg0: i32) -> (i32, i32) {
    %c0_i32 = arith.constant 0 : i32
    %c0_i32_0 = arith.constant 0 : i32
    %c0_i32_1 = arith.constant 0 : i32
    return %c0_i32, %c0_i32_0 : i32, i32
  }
}

module attributes {stable_mosaic.version = 11 : i64} {
  func.func @_token_head_kernel(%arg0: i32, %arg1: memref<8x32xf32, #tpu.memory_space<vmem>>, %arg2: memref<32x128xbf16, #tpu.memory_space<vmem>>, %arg3: memref<1x128xf32, #tpu.memory_space<vmem>>, %arg4: memref<8x128xf32, #tpu.memory_space<vmem>>) attributes {dimension_semantics = [#tpu.dimension_semantics<parallel>], iteration_bounds = array<i64: 2>, scalar_prefetch = 0 : i64, scratch_operands = 0 : i64, tpu.core_type = #tpu.core_type<tc>, window_params = [{transform_indices = @transform_0, window_bounds = array<i64: 8, 32>}, {pipeline_mode = #tpu.pipeline_mode<synchronous>, transform_indices = @transform_1, window_bounds = array<i64: 32, 128>}, {pipeline_mode = #tpu.pipeline_mode<synchronous>, transform_indices = @transform_2, window_bounds = array<i64: 1, 128>}, {transform_indices = @transform_3, window_bounds = array<i64: 8, 128>}]} {
    %c0 = arith.constant 0 : index
    %c0_0 = arith.constant 0 : index
    %0 = vector.load %arg1[%c0, %c0_0] : memref<8x32xf32, #tpu.memory_space<vmem>>, vector<8x32xf32>
    %1 = arith.truncf %0 : vector<8x32xf32> to vector<8x32xbf16>
    %c0_1 = arith.constant 0 : index
    %c0_2 = arith.constant 0 : index
    %2 = vector.load %arg2[%c0_1, %c0_2] : memref<32x128xbf16, #tpu.memory_space<vmem>>, vector<32x128xbf16>
    %cst = arith.constant dense<0.000000e+00> : vector<8x128xf32>
    %3 = tpu.matmul %1, %2, %cst {dimension_numbers = #tpu.dot_dimension_numbers<[1], [0], [0], [1], [0, 0, 1, 1], [], []>} : vector<8x32xbf16>, vector<32x128xbf16>, vector<8x128xf32> -> vector<8x128xf32>
    %c0_3 = arith.constant 0 : index
    %c0_4 = arith.constant 0 : index
    %4 = vector.load %arg3[%c0_3, %c0_4] : memref<1x128xf32, #tpu.memory_space<vmem>>, vector<1x128xf32>
    %5 = vector.broadcast %4 : vector<1x128xf32> to vector<8x128xf32>
    %6 = arith.addf %3, %5 : vector<8x128xf32>
    %c0_5 = arith.constant 0 : index
    %c0_6 = arith.constant 0 : index
    %7 = vector.load %arg4[%c0_5, %c0_6] : memref<8x128xf32, #tpu.memory_space<vmem>>, vector<8x128xf32>
    tpu.vector_store %arg4[%c0_5, %c0_6], %6 {strides = array<i32>} : memref<8x128xf32, #tpu.memory_space<vmem>>, vector<8x128xf32>,
    return
  }
  func.func @transform_0(%arg0: i32) -> (i32, i32) {
    %c0_i32 = arith.constant 0 : i32
    %c0_i32_0 = arith.constant 0 : i32
    return %arg0, %c0_i32 : i32, i32
  }
  func.func @transform_1(%arg0: i32) -> (i32, i32) {
    %c0_i32 = arith.constant 0 : i32
    %c0_i32_0 = arith.constant 0 : i32
    %c0_i32_1 = arith.constant 0 : i32
    return %c0_i32, %c0_i32_0 : i32, i32
  }
  func.func @transform_2(%arg0: i32) -> (i32, i32) {
    %c0_i32 = arith.constant 0 : i32
    %c0_i32_0 = arith.constant 0 : i32
    %c0_i32_1 = arith.constant 0 : i32
    return %c0_i32, %c0_i32_0 : i32, i32
  }
  func.func @transform_3(%arg0: i32) -> (i32, i32) {
    %c0_i32 = arith.constant 0 : i32
    %c0_i32_0 = arith.constant 0 : i32
    return %arg0, %c0_i32 : i32, i32
  }
}

</mosaic_0001>

<llo_original>
// kernel: main_module_forward.3
$region0: #{main_module_forward.3}
  #allocation0 [shape = 'u32[]', space=smem, size = 0x4, offset = 0x4, fixed_abs, tag = 'smem constant byte address 0x4 - core index']
  #allocation1 [shape = 'u32[144,128]{1,0:T(1,128)}', space=vmem, size = 0x12000, scoped, tag = 'internal scratch']
  %s0 = inlined_call_operand.vmem [shape: f32[16,32], index: 0, kind: input, shape index: {}]
  %s1 = inlined_call_operand.vmem [shape: bf16[32,128], index: 1, kind: input, shape index: {}]
  %s2 = inlined_call_operand.vmem [shape: f32[1,128], index: 2, kind: input, shape index: {}]
  %s3 = inlined_call_operand.vmem [shape: f32[16,128], index: 3, kind: output, shape index: {}]
  %s4 = sld [smem:[#allocation0]]
  $region45: #{main_module_forward.3} parent=0
    _
  %s6 = ssub.s32 1, %s4
  %s7 = scalar_select 0, %s6, %s4
  loop: start=0, step=1, limit=4
  $region2: #{main_module_forward.3} parent=0 // loop_pre_header
    _
  $region3: #{main_module_forward.3} parent=0 // loop_header
    %s9 = sphi 0, %s13
    %p10 = scmp.ge.s32.totalorder %s9, 4
    %s19 = sphi 0, %s21
    %s22 = sphi 0, %s19
    %s23 = sphi 0, %s22
    %s39 = sphi 0, %s23
    %s43 = sphi 0, %s43
    %s45 = sphi 0, %s43
    %s46 = sphi 0, %s45
    %s60 = sphi 0, %s46
    %s64 = sphi 0, %s64
    %s66 = sphi 0, %s64
    %s67 = sphi 0, %s66
    %s81 = sphi 0, %s67
    %s87 = sphi 0, %s89
    %s90 = sphi 0, %s87
    %s91 = sphi 0, %s90
    %s107 = sphi 0, %s91
  $region4: #{main_module_forward.3} parent=0 // loop_header_branch
    %12 = sbr.rel (%p10) target = $region8
  $region5: #{main_module_forward.3} parent=0 // loop_body
    %s14 = ssub.s32 %s9, 1
    %s15 = ssub.s32 %s9, 2
    %s16 = sadd.s32 %s9, 1
    %s17 = ssub.s32 %s9, %s16
    %p18 = scmp.eq.s32.totalorder %s17, 0
    %s20 = sadd.s32 %s19, 1
    %s21 = scalar_select %p18, %s19, %s20
    %p24 = pneg %p18
    %p25 = scmp.eq.s32.totalorder %s9, 1
    %p26 = por %p24, %p25
    %p27 = scmp.ne.s32.totalorder %s19, %s22
    %p28 = scmp.eq.s32.totalorder %s9, 0
    %p29 = por %p27, %p28
    %p30 = scmp.ne.s32.totalorder %s19, %s22
    %p31 = scmp.eq.s32.totalorder %s14, 1
    %p32 = por %p30, %p31
    %p33 = scmp.ne.s32.totalorder %s22, %s23
    %p34 = scmp.eq.s32.totalorder %s14, 0
    %p35 = por %p33, %p34
    %p36 = scmp.ne.s32.totalorder %s22, %s23
    %p37 = scmp.eq.s32.totalorder %s15, 1
    %p38 = por %p36, %p37
    %p40 = scmp.ne.s32.totalorder %s23, %s39
    %p41 = scmp.eq.s32.totalorder %s15, 0
    %p42 = por %p40, %p41
    %s44 = sadd.s32 %s43, 1
    %p47 = scmp.eq.s32.totalorder %s9, 1
    %p48 = scmp.ne.s32.totalorder %s43, %s45
    %p49 = scmp.eq.s32.totalorder %s9, 0
    %p50 = por %p48, %p49
    %p51 = scmp.ne.s32.totalorder %s43, %s45
    %p52 = scmp.eq.s32.totalorder %s14, 1
    %p53 = por %p51, %p52
    %p54 = scmp.ne.s32.totalorder %s45, %s46
    %p55 = scmp.eq.s32.totalorder %s14, 0
    %p56 = por %p54, %p55
    %p57 = scmp.ne.s32.totalorder %s45, %s46
    %p58 = scmp.eq.s32.totalorder %s15, 1
    %p59 = por %p57, %p58
    %p61 = scmp.ne.s32.totalorder %s46, %s60
    %p62 = scmp.eq.s32.totalorder %s15, 0
    %p63 = por %p61, %p62
    %s65 = sadd.s32 %s64, 1
    %p68 = scmp.eq.s32.totalorder %s9, 1
    %p69 = scmp.ne.s32.totalorder %s64, %s66
    %p70 = scmp.eq.s32.totalorder %s9, 0
    %p71 = por %p69, %p70
    %p72 = scmp.ne.s32.totalorder %s64, %s66
    %p73 = scmp.eq.s32.totalorder %s14, 1
    %p74 = por %p72, %p73
    %p75 = scmp.ne.s32.totalorder %s66, %s67
    %p76 = scmp.eq.s32.totalorder %s14, 0
    %p77 = por %p75, %p76
    %p78 = scmp.ne.s32.totalorder %s66, %s67
    %p79 = scmp.eq.s32.totalorder %s15, 1
    %p80 = por %p78, %p79
    %p82 = scmp.ne.s32.totalorder %s67, %s81
    %p83 = scmp.eq.s32.totalorder %s15, 0
    %p84 = por %p82, %p83
    %s85 = ssub.s32 %s9, %s16
    %p86 = scmp.eq.s32.totalorder %s85, 0
    %s88 = sadd.s32 %s87, 1
    %s89 = scalar_select %p86, %s87, %s88
    %p92 = pneg %p86
    %p93 = scmp.eq.s32.totalorder %s9, 1
    %p94 = por %p92, %p93
    %p95 = scmp.ne.s32.totalorder %s87, %s90
    %p96 = scmp.eq.s32.totalorder %s9, 0
    %p97 = por %p95, %p96
    %p98 = scmp.ne.s32.totalorder %s87, %s90
    %p99 = scmp.eq.s32.totalorder %s14, 1
    %p100 = por %p98, %p99
    %p101 = scmp.ne.s32.totalorder %s90, %s91
    %p102 = scmp.eq.s32.totalorder %s14, 0
    %p103 = por %p101, %p102
    %p104 = scmp.ne.s32.totalorder %s90, %s91
    %p105 = scmp.eq.s32.totalorder %s15, 1
    %p106 = por %p104, %p105
    %p108 = scmp.ne.s32.totalorder %s91, %s107
    %p109 = scmp.eq.s32.totalorder %s15, 0
    %p110 = por %p108, %p109
    %p111 = scmp.le.s32.totalorder 1, %s9
    %p112 = scmp.lt.s32.totalorder %s9, 3
    %p113 = pnand %p111, %p112
    %p114 = pneg %p113
    // Predicated region
    $region9: #{main_module_forward.3} parent=5 // pred_check
      _
    $region10: #{main_module_forward.3} parent=5 // pred_check_branch
      %116 = sbr.rel (%p113) target = $region12
    $region11: #{main_module_forward.3} parent=5 // pred_region
      %s117 = ssub.s32 %s9, 1
      // Predicated region
      $region13: #{main_module_forward.3} parent=11 // pred_check
        %p118 = pneg %p56
      $region14: #{main_module_forward.3} parent=11 // pred_check_branch
        %120 = sbr.rel (%p118) target = $region16
      $region15: #{main_module_forward.3} parent=11 // pred_region
        _
      $region16: #{main_module_forward.3} parent=11 // pred_fallthru
        _
      // Predicated region
      $region17: #{main_module_forward.3} parent=11 // pred_check
        %p121 = pneg %p77
      $region18: #{main_module_forward.3} parent=11 // pred_check_branch
        %123 = sbr.rel (%p121) target = $region20
      $region19: #{main_module_forward.3} parent=11 // pred_region
        _
      $region20: #{main_module_forward.3} parent=11 // pred_fallthru
        _
    $region12: #{main_module_forward.3} parent=5 // pred_fallthru
      _
    %p124 = scmp.lt.s32.totalorder %s9, 2
    // Predicated region
    $region21: #{main_module_forward.3} parent=5 // pred_check
      %p125 = pneg %p124
    $region22: #{main_module_forward.3} parent=5 // pred_check_branch
      %127 = sbr.rel (%p125) target = $region24
    $region23: #{main_module_forward.3} parent=5 // pred_region
      // Predicated region
      $region25: #{main_module_forward.3} parent=23 // pred_check
        %p128 = pneg %p29
      $region26: #{main_module_forward.3} parent=23 // pred_check_branch
        %130 = sbr.rel (%p128) target = $region28
      $region27: #{main_module_forward.3} parent=23 // pred_region
        %p131 = scmp.lt.s32.totalorder %s9, 1
        %s132 = scalar_select %p131, %s9, 1
        %s133 = smul.addr %s132, 8
        %s134 = scalar_lea.vmem %s0, %s133
      $region28: #{main_module_forward.3} parent=23 // pred_fallthru
        _
    $region24: #{main_module_forward.3} parent=5 // pred_fallthru
      _
    %p135 = scmp.le.s32.totalorder 1, %s9
    %p136 = scmp.lt.s32.totalorder %s9, 3
    %p137 = pnand %p135, %p136
    %p138 = pneg %p137
    // Predicated region
    $region29: #{main_module_forward.3} parent=5 // pred_check
      _
    $region30: #{main_module_forward.3} parent=5 // pred_check_branch
      %140 = sbr.rel (%p137) target = $region32
    $region31: #{main_module_forward.3} parent=5 // pred_region
      %s141 = ssub.s32 %s9, 1
      %p142 = scmp.lt.s32.totalorder %s14, 1
      %s143 = scalar_select %p142, %s14, 1
      %s144 = smul.addr %s143, 8
      %s145 = scalar_lea.vmem %s0, %s144
      %p146 = pneg %p35
      %p147 = pneg %p32
      %p148 = pneg %p56
      %p149 = pneg %p53
      %p150 = pneg %p77
      %p151 = pneg %p74
      %p152 = pneg %p103
      %p153 = pneg %p100
      %p154 = scmp.lt.s32.totalorder %s14, 1
      %s155 = scalar_select %p154, %s14, 1
      %s156 = smul.addr %s155, 8
      %s157 = scalar_lea.vmem %s3, %s156
      %p158 = scmp.lt.s32.totalorder %s14, 1
      %s159 = scalar_select %p158, %s14, 1
      %s160 = smul.addr %s159, 8
      %s161 = scalar_lea.vmem %s0, %s160
      %p162 = scmp.lt.s32.totalorder %s14, 1
      %s163 = scalar_select %p162, %s14, 1
      %s164 = smul.addr %s163, 8
      %s165 = scalar_lea.vmem %s3, %s164
      %v167 = vld [vmem:[%s161] sm:$0xff]
      %v168 = vpack.c.bf16 %v167, %v167
      %v169 = vld [vmem:[%s1] sm:$0xf]
      %v170 = vld [vmem:[%s1 + $0x4] sm:$0xf]
      %v171 = vld [vmem:[%s1 + $0x8] sm:$0xf]
      %v172 = vld [vmem:[%s1 + $0xc] sm:$0xf]
      %v173 = vld [vmem:[%s2] sm:$0x1]
      %v175 = vlaneseq
      %v176 = vshrl.u32 %v175, 7
      %v177 = vsub.s32 0, %v176
      %v178 = vrot.slane %v173, %v177
      %v184 = vunpack.c.l.b16 %v169
      %v185 = vunpack.c.l.b16 %v170
      %v186 = vunpack.c.l.b16 %v171
      %v187 = vunpack.c.l.b16 %v172
      %v188 = vpack.c.b16 %v185, %v184
      %v189 = vpack.c.b16 %v187, %v186
      %vm192 = vcmask 261120
      %v194 = vsel %vm192, %v168, 0
      %196 = vmatprep.subr.bf16.mxu0 0
      %197 = vmatpush1.bf16.msra.mxu0 %v188
      %198 = vmatprep.subr.bf16.mxu0 0
      %199 = vmatpush1.bf16.msra.mxu0 %v189
      %200 = vmatprep.subr.bf16.mxu0 0
      %201 = vmatpush1.bf16.msra.mxu0 0
      %202 = vmatprep.subr.bf16.mxu0 0
      %203 = vmatpush1.bf16.msra.mxu0 0
      %204 = vmatprep.subr.bf16.mxu0 0
      %205 = vmatpush1.bf16.msra.mxu0 0
      %206 = vmatprep.subr.bf16.mxu0 0
      %207 = vmatpush1.bf16.msra.mxu0 0
      %208 = vmatprep.subr.bf16.mxu0 0
      %209 = vmatpush1.bf16.msra.mxu0 0
      %210 = vmatprep.subr.bf16.mxu0 0
      %211 = vmatpush1.bf16.msra.mxu0 0
      %212 = vmatprep.subr.bf16.mxu0 0
      %213 = vmatpush1.bf16.msra.mxu0 0
      %214 = vmatprep.subr.bf16.mxu0 0
      %215 = vmatpush1.bf16.msra.mxu0 0
      %216 = vmatprep.subr.bf16.mxu0 0
      %217 = vmatpush1.bf16.msra.mxu0 0
      %218 = vmatprep.subr.bf16.mxu0 0
      %219 = vmatpush1.bf16.msra.mxu0 0
      %220 = vmatprep.subr.bf16.mxu0 0
      %221 = vmatpush1.bf16.msra.mxu0 0
      %222 = vmatprep.subr.bf16.mxu0 0
      %223 = vmatpush1.bf16.msra.mxu0 0
      %224 = vmatprep.subr.bf16.mxu0 0
      %225 = vmatpush1.bf16.msra.mxu0 0
      %226 = vmatprep.subr.bf16.mxu0 0
      %227 = vmatpush1.bf16.msra.mxu0 0
      %228 = vmatprep.mubr.bf16.mxu0 0
      %229 = vmatmul.mubr.bf16.gmra.mrb[0].mxu0 %v194
      %v230 = vpop.f32.mrb[0].mxu0
      %v231 = vadd.f32 %v178, %v230
      %v232 = vpop.f32.mrb[0].mxu0
      %v233 = vpop.f32.mrb[0].mxu0
      %v234 = vpop.f32.mrb[0].mxu0
      %235 = vdwg.mxu0
      %236 = vst [vmem:[%s165] sm:$0xff] %v231
      %p237 = scmp.lt.s32.totalorder %s14, 1
      %s238 = scalar_select %p237, %s14, 1
      %s239 = smul.addr %s238, 8
      %s240 = scalar_lea.vmem %s3, %s239
      // Predicated region
      $region33: #{main_module_forward.3} parent=31 // pred_check
        %p241 = pneg %p100
      $region34: #{main_module_forward.3} parent=31 // pred_check_branch
        %243 = sbr.rel (%p241) target = $region36
      $region35: #{main_module_forward.3} parent=31 // pred_region
        _
      $region36: #{main_module_forward.3} parent=31 // pred_fallthru
        _
    $region32: #{main_module_forward.3} parent=5 // pred_fallthru
      _
    %p244 = scmp.le.s32.totalorder 2, %s9
    // Predicated region
    $region37: #{main_module_forward.3} parent=5 // pred_check
      %p245 = pneg %p244
    $region38: #{main_module_forward.3} parent=5 // pred_check_branch
      %247 = sbr.rel (%p245) target = $region40
    $region39: #{main_module_forward.3} parent=5 // pred_region
      %s248 = ssub.s32 %s9, 2
      // Predicated region
      $region41: #{main_module_forward.3} parent=39 // pred_check
        %p249 = pneg %p106
      $region42: #{main_module_forward.3} parent=39 // pred_check_branch
        %251 = sbr.rel (%p249) target = $region44
      $region43: #{main_module_forward.3} parent=39 // pred_region
        %p252 = scmp.lt.s32.totalorder %s15, 1
        %s253 = scalar_select %p252, %s15, 1
        %s254 = smul.addr %s253, 8
        %s255 = scalar_lea.vmem %s3, %s254
      $region44: #{main_module_forward.3} parent=39 // pred_fallthru
        _
    $region40: #{main_module_forward.3} parent=5 // pred_fallthru
      _
  $region6: #{main_module_forward.3} parent=0 // loop_footer
    %s13 = sadd.s32 1, %s9
  $region7: #{main_module_forward.3} parent=0 // loop_footer_branch
    %8 = sbr.rel target = $region3
  $region8: #{main_module_forward.3} parent=0 // loop_exit
    _

// kernel: main_module_forward.2
$region0: #{main_module_forward.2}
  #allocation0 [shape = 'u32[]', space=smem, size = 0x4, offset = 0x4, fixed_abs, tag = 'smem constant byte address 0x4 - core index']
  #allocation1 [shape = 'u32[144,128]{1,0:T(1,128)}', space=vmem, size = 0x12000, scoped, tag = 'internal scratch']
  %s0 = inlined_call_operand.vmem [shape: f32[2,32], index: 0, kind: input, shape index: {}]
  %s1 = inlined_call_operand.vmem [shape: bf16[32,32], index: 1, kind: input, shape index: {}]
  %s2 = inlined_call_operand.vmem [shape: f32[1,32], index: 2, kind: input, shape index: {}]
  %s3 = inlined_call_operand.vmem [shape: bf16[32,128], index: 3, kind: input, shape index: {}]
  %s4 = inlined_call_operand.vmem [shape: f32[1,128], index: 4, kind: input, shape index: {}]
  %s5 = inlined_call_operand.hbm [shape: f32[2,32], index: 5, kind: output, shape index: {0}]
  %s6 = inlined_call_operand.vmem [shape: f32[2,128], index: 6, kind: output, shape index: {1}]
  %7 = xla_tuple %s5, %s6
  %s8 = sld [smem:[#allocation0]]
  $region38: #{main_module_forward.2} parent=0
    _
  %s10 = ssub.s32 1, %s8
  %s11 = scalar_select 0, %s10, %s8
  $region1: #{main_module_forward.2} parent=0
    #allocation2 [shape = 'u8[1024]{0}', space=vmem, size = 0x400, scoped, tag = 'output window, operand 0, single buffered']
    #allocation3 [shape = 's32[1]{0}', space=sflag, size = 0x4, scoped, tag = 'scoped memory for main_module_forward.2']
    %12 = vsyncpa [#allocation3], 0
    // Predicated region
    $region2: #{main_module_forward.2} parent=1 // pred_check
      _
    $region3: #{main_module_forward.2} parent=1 // pred_check_branch
      %14 = sbr.rel (0) target = $region5
    $region4: #{main_module_forward.2} parent=1 // pred_region
      _
    $region5: #{main_module_forward.2} parent=1 // pred_fallthru
      _
    // Predicated region
    $region6: #{main_module_forward.2} parent=1 // pred_check
      _
    $region7: #{main_module_forward.2} parent=1 // pred_check_branch
      %16 = sbr.rel (0) target = $region9
    $region8: #{main_module_forward.2} parent=1 // pred_region
      _
    $region9: #{main_module_forward.2} parent=1 // pred_fallthru
      _
    // Predicated region
    $region10: #{main_module_forward.2} parent=1 // pred_check
      _
    $region11: #{main_module_forward.2} parent=1 // pred_check_branch
      %18 = sbr.rel (0) target = $region13
    $region12: #{main_module_forward.2} parent=1 // pred_region
      _
    $region13: #{main_module_forward.2} parent=1 // pred_fallthru
      _
    // Predicated region
    $region14: #{main_module_forward.2} parent=1 // pred_check
      _
    $region15: #{main_module_forward.2} parent=1 // pred_check_branch
      %20 = sbr.rel (0) target = $region17
    $region16: #{main_module_forward.2} parent=1 // pred_region
      _
    $region17: #{main_module_forward.2} parent=1 // pred_fallthru
      _
    // Predicated region
    $region18: #{main_module_forward.2} parent=1 // pred_check
      _
    $region19: #{main_module_forward.2} parent=1 // pred_check_branch
      %22 = sbr.rel (0) target = $region21
    $region20: #{main_module_forward.2} parent=1 // pred_region
      _
    $region21: #{main_module_forward.2} parent=1 // pred_fallthru
      _
    %v24 = vld [vmem:[%s0] sm:$0x3]
    %v25 = vpack.c.bf16 %v24, %v24
    %v26 = vld [vmem:[%s1] sm:$0xf]
    %v27 = vld [vmem:[%s1 + $0x4] sm:$0xf]
    %v28 = vld [vmem:[%s1 + $0x8] sm:$0xf]
    %v29 = vld [vmem:[%s1 + $0xc] sm:$0xf]
    %v30 = vld [vmem:[%s2] sm:$0x1]
    %v32 = vlaneseq
    %v33 = vshrl.u32 %v32, 7
    %v34 = vsub.s32 0, %v33
    %v35 = vrot.slane %v30, %v34
    %v41 = vunpack.c.l.b16 %v26
    %v42 = vunpack.c.l.b16 %v27
    %v43 = vunpack.c.l.b16 %v28
    %v44 = vunpack.c.l.b16 %v29
    %v45 = vpack.c.b16 %v42, %v41
    %v46 = vpack.c.b16 %v44, %v43
    %vm49 = vcmask 261120
    %v51 = vsel %vm49, %v25, 0
    %53 = vmatprep.subr.bf16.mxu0 0
    %54 = vmatpush1.bf16.msra.mxu0 %v45
    %55 = vmatprep.subr.bf16.mxu0 0
    %56 = vmatpush1.bf16.msra.mxu0 %v46
    %57 = vmatprep.subr.bf16.mxu0 0
    %58 = vmatpush1.bf16.msra.mxu0 0
    %59 = vmatprep.subr.bf16.mxu0 0
    %60 = vmatpush1.bf16.msra.mxu0 0
    %61 = vmatprep.subr.bf16.mxu0 0
    %62 = vmatpush1.bf16.msra.mxu0 0
    %63 = vmatprep.subr.bf16.mxu0 0
    %64 = vmatpush1.bf16.msra.mxu0 0
    %65 = vmatprep.subr.bf16.mxu0 0
    %66 = vmatpush1.bf16.msra.mxu0 0
    %67 = vmatprep.subr.bf16.mxu0 0
    %68 = vmatpush1.bf16.msra.mxu0 0
    %69 = vmatprep.subr.bf16.mxu0 0
    %70 = vmatpush1.bf16.msra.mxu0 0
    %71 = vmatprep.subr.bf16.mxu0 0
    %72 = vmatpush1.bf16.msra.mxu0 0
    %73 = vmatprep.subr.bf16.mxu0 0
    %74 = vmatpush1.bf16.msra.mxu0 0
    %75 = vmatprep.subr.bf16.mxu0 0
    %76 = vmatpush1.bf16.msra.mxu0 0
    %77 = vmatprep.subr.bf16.mxu0 0
    %78 = vmatpush1.bf16.msra.mxu0 0
    %79 = vmatprep.subr.bf16.mxu0 0
    %80 = vmatpush1.bf16.msra.mxu0 0
    %81 = vmatprep.subr.bf16.mxu0 0
    %82 = vmatpush1.bf16.msra.mxu0 0
    %83 = vmatprep.subr.bf16.mxu0 0
    %84 = vmatpush1.bf16.msra.mxu0 0
    %85 = vmatprep.mubr.bf16.mxu0 0
    %86 = vmatmul.mubr.bf16.gmra.mrb[0].mxu0 %v51
    %v87 = vpop.f32.mrb[0].mxu0
    %v88 = vadd.f32 %v35, %v87
    %v89 = vpop.f32.mrb[0].mxu0
    %v90 = vpop.f32.mrb[0].mxu0
    %v91 = vpop.f32.mrb[0].mxu0
    %92 = vdwg.mxu0
    %v93 = vtanh.pop %v88
    %vm94 = vcmask 254976
    %95 = vst.msk [vmem:[#allocation2] sm:$0x3] %vm94, %v93
    %v96 = vpack.c.bf16 %v93, %v93
    %v97 = vld [vmem:[%s3] sm:$0xf]
    %v98 = vld [vmem:[%s3 + $0x4] sm:$0xf]
    %v99 = vld [vmem:[%s3 + $0x8] sm:$0xf]
    %v100 = vld [vmem:[%s3 + $0xc] sm:$0xf]
    %v101 = vld [vmem:[%s4] sm:$0x1]
    %v103 = vlaneseq
    %v104 = vshrl.u32 %v103, 7
    %v105 = vsub.s32 0, %v104
    %v106 = vrot.slane %v101, %v105
    %v112 = vunpack.c.l.b16 %v97
    %v113 = vunpack.c.l.b16 %v98
    %v114 = vunpack.c.l.b16 %v99
    %v115 = vunpack.c.l.b16 %v100
    %v116 = vpack.c.b16 %v113, %v112
    %v117 = vpack.c.b16 %v115, %v114
    %v121 = vsel %vm49, %v96, 0
    %123 = vmatprep.subr.bf16.mxu0 0
    %124 = vmatpush1.bf16.msra.mxu0 %v116
    %125 = vmatprep.subr.bf16.mxu0 0
    %126 = vmatpush1.bf16.msra.mxu0 %v117
    %127 = vmatprep.subr.bf16.mxu0 0
    %128 = vmatpush1.bf16.msra.mxu0 0
    %129 = vmatprep.subr.bf16.mxu0 0
    %130 = vmatpush1.bf16.msra.mxu0 0
    %131 = vmatprep.subr.bf16.mxu0 0
    %132 = vmatpush1.bf16.msra.mxu0 0
    %133 = vmatprep.subr.bf16.mxu0 0
    %134 = vmatpush1.bf16.msra.mxu0 0
    %135 = vmatprep.subr.bf16.mxu0 0
    %136 = vmatpush1.bf16.msra.mxu0 0
    %137 = vmatprep.subr.bf16.mxu0 0
    %138 = vmatpush1.bf16.msra.mxu0 0
    %139 = vmatprep.subr.bf16.mxu0 0
    %140 = vmatpush1.bf16.msra.mxu0 0
    %141 = vmatprep.subr.bf16.mxu0 0
    %142 = vmatpush1.bf16.msra.mxu0 0
    %143 = vmatprep.subr.bf16.mxu0 0
    %144 = vmatpush1.bf16.msra.mxu0 0
    %145 = vmatprep.subr.bf16.mxu0 0
    %146 = vmatpush1.bf16.msra.mxu0 0
    %147 = vmatprep.subr.bf16.mxu0 0
    %148 = vmatpush1.bf16.msra.mxu0 0
    %149 = vmatprep.subr.bf16.mxu0 0
    %150 = vmatpush1.bf16.msra.mxu0 0
    %151 = vmatprep.subr.bf16.mxu0 0
    %152 = vmatpush1.bf16.msra.mxu0 0
    %153 = vmatprep.subr.bf16.mxu0 0
    %154 = vmatpush1.bf16.msra.mxu0 0
    %155 = vmatprep.mubr.bf16.mxu0 0
    %156 = vmatmul.mubr.bf16.gmra.mrb[0].mxu0 %v121
    %v157 = vpop.f32.mrb[0].mxu0
    %v158 = vadd.f32 %v106, %v157
    %v159 = vpop.f32.mrb[0].mxu0
    %v160 = vpop.f32.mrb[0].mxu0
    %v161 = vpop.f32.mrb[0].mxu0
    %162 = vdwg.mxu0
    %163 = vst [vmem:[%s6] sm:$0x3] %v158
    // Predicated region
    $region22: #{main_module_forward.2} parent=1 // pred_check
      _
    $region23: #{main_module_forward.2} parent=1 // pred_check_branch
      %165 = sbr.rel (0) target = $region25
    $region24: #{main_module_forward.2} parent=1 // pred_region
      %s167 = ssub.s32 32, 32
      %168 = vsyncadd [#allocation3], %s167
      %s170 = sshll.u32 [#allocation2], 4
      %s171 = int_to_ptr.vmem [resolvable:$true] %s170
      %173 = dma.vmem_to_hbm [thread:$0]  %s171, 32, %s5, [#allocation3]
    $region25: #{main_module_forward.2} parent=1 // pred_fallthru
      _
    // Predicated region
    $region26: #{main_module_forward.2} parent=1 // pred_check
      _
    $region27: #{main_module_forward.2} parent=1 // pred_check_branch
      %175 = sbr.rel (0) target = $region29
    $region28: #{main_module_forward.2} parent=1 // pred_region
      _
    $region29: #{main_module_forward.2} parent=1 // pred_fallthru
      _
    // Predicated region
    $region30: #{main_module_forward.2} parent=1 // pred_check
      _
    $region31: #{main_module_forward.2} parent=1 // pred_check_branch
      %177 = sbr.rel (0) target = $region33
    $region32: #{main_module_forward.2} parent=1 // pred_region
      %178 = dma.done [#allocation3], 32
    $region33: #{main_module_forward.2} parent=1 // pred_fallthru
      _
    // Predicated region
    $region34: #{main_module_forward.2} parent=1 // pred_check
      _
    $region35: #{main_module_forward.2} parent=1 // pred_check_branch
      %180 = sbr.rel (0) target = $region37
    $region36: #{main_module_forward.2} parent=1 // pred_region
      _
    $region37: #{main_module_forward.2} parent=1 // pred_fallthru
      _
    %181 = vsyncpa [#allocation3], 1

</llo_original>
